<compile_context>
chip_gen: v7x
topology: tpu7x:2x2x1
jax: 0.10.0
libtpu: 0.0.40
codegen_flags: <defaults>
</compile_context>

<pallas_src>
import functools

import jax
import jax.numpy as jnp
from jax import lax
from jax.experimental import pallas as pl
from jax.experimental.pallas import tpu as pltpu


def _ensemble_packed_kernel(x_ref, w1_ref, b1_ref, w2_ref, b2_ref, esel_ref,
                            out_ref, energy_ref, *, n_atoms):
    """Single-step kernel: the whole ensemble is two packed matmuls.

    x_ref    : [N_pad, D]        shared per-atom features (rows >= n_atoms are zero pad)
    w1_ref   : [D, KH_pad]       all member first-layer weights, concat along lanes
    b1_ref   : [1, KH_pad]
    w2_ref   : [KH_pad, KO_pad]  block-diagonal second-layer weights
    b2_ref   : [1, KO_pad]
    esel_ref : [KO_pad, E_pad]   one-hot selector of each member's energy column
    out_ref  : [N_pad, KO_pad]   lane-dense raw outputs (member k, output o at lane k*O+o)
    energy_ref: [1, E_pad]       per-member energies in lanes [0, K)
    """
    x = x_ref[...]                                                     # [N_pad, D]
    h = jnp.dot(x, w1_ref[...], preferred_element_type=jnp.float32) + b1_ref[...]
    h = jnp.maximum(h, 0.0)                                            # ReLU (VPU)
    y = jnp.dot(h, w2_ref[...], preferred_element_type=jnp.float32) + b2_ref[...]
    out_ref[...] = y.astype(out_ref.dtype)                             # unmasked lane-dense store

    # Per-member energy: zero out padded atom rows (their bias-only activations
    # would otherwise pollute the sum), reduce over atoms, then pick each
    # member's energy column with a tiny selector matmul.
    row = lax.broadcasted_iota(jnp.int32, y.shape, 0)
    y_valid = jnp.where(row < n_atoms, y, 0.0)
    colsum = jnp.sum(y_valid, axis=0, keepdims=True)                   # [1, KO_pad] (XLU)
    energy_ref[...] = jnp.dot(colsum, esel_ref[...],
                              preferred_element_type=jnp.float32
                              ).astype(energy_ref.dtype)               # [1, E_pad]


def ensemble_forward_pallas(x, w1, b1, w2, b2):
    """Runs all K member MLPs in one pallas_call.

    x  : [N, D]      shared per-atom features
    w1 : [K, D, H]   first-layer weights of every member
    b1 : [K, 1, H]
    w2 : [K, H, O]   second-layer weights (O = 3 force comps + 1 energy)
    b2 : [K, 1, O]
    returns (raw [N, K, O], energies [K])
    """
    K, D, H = w1.shape
    O = w2.shape[-1]
    N = x.shape[0]

    KH, KO = K * H, K * O
    KH_pad = max(128, ((KH + 127) // 128) * 128)   # hidden lanes, padded to full vregs
    KO_pad = max(128, ((KO + 127) // 128) * 128)   # output lanes, padded -> unmasked stores
    E_pad = 128                                    # energy lanes, padded -> unmasked store
    N_pad = ((N + 7) // 8) * 8                     # sublane-align atom rows

    f32 = jnp.float32
    x_pad = jnp.zeros((N_pad, D), f32).at[:N, :].set(x.astype(f32))

    # W1: member-major lane concat  [D, K*H] -> pad lanes to KH_pad.
    w1_pack = jnp.zeros((D, KH_pad), f32).at[:, :KH].set(
        jnp.transpose(w1, (1, 0, 2)).reshape(D, KH).astype(f32))
    b1_pack = jnp.zeros((1, KH_pad), f32).at[0, :KH].set(
        b1[:, 0, :].reshape(KH).astype(f32))

    # W2: block-diagonal so one matmul evaluates every member independently.
    w2_bd = jax.scipy.linalg.block_diag(*[w2[k].astype(f32) for k in range(K)])  # [KH, KO]
    w2_pack = jnp.zeros((KH_pad, KO_pad), f32).at[:KH, :KO].set(w2_bd)
    b2_pack = jnp.zeros((1, KO_pad), f32).at[0, :KO].set(
        b2[:, 0, :].reshape(KO).astype(f32))

    # Energy-column selector: member k's energy sits at lane k*O + (O-1).
    esel = jnp.zeros((KO_pad, E_pad), f32).at[
        jnp.arange(K) * O + (O - 1), jnp.arange(K)].set(1.0)

    out_slab, energy_slab = pl.pallas_call(
        functools.partial(_ensemble_packed_kernel, n_atoms=N),
        out_shape=(
            jax.ShapeDtypeStruct((N_pad, KO_pad), f32),
            jax.ShapeDtypeStruct((1, E_pad), f32),
        ),
        in_specs=[pl.BlockSpec(memory_space=pltpu.MemorySpace.VMEM)] * 6,
        out_specs=(
            pl.BlockSpec(memory_space=pltpu.MemorySpace.VMEM),
            pl.BlockSpec(memory_space=pltpu.MemorySpace.VMEM),
        ),
    )(x_pad, w1_pack, b1_pack, w2_pack, b2_pack, esel)

    raw = out_slab[:N, :KO].reshape(N, K, O)   # [N, K, O]
    energies = energy_slab[0, :K]              # [K]
    return raw, energies


def ensemble_forward(xyz, x, params):
    """Mirrors Ensemble.forward: run every member, stack outputs along dim=-1
    (except 'xyz', 'embedding', 'node_feats')."""
    w1, b1, w2, b2 = params
    K = w1.shape[0]
    raw, energies = ensemble_forward_pallas(x, w1, b1, w2, b2)

    # Same stacked layout the torch loop would produce, without per-k slicing:
    #   energy: stack of K scalars         -> [K]
    #   forces: stack of K [N,3] tensors   -> [N, 3, K]
    forces = jnp.transpose(raw[..., :3], (0, 2, 1))        # [N, 3, K]

    stacked_outputs = {
        "xyz": xyz,                  # taken from the first member, shared input
        "energy": energies,          # [K]
        "forces": forces,            # [N, 3, K]
        "embedding": None,           # member nets expose no embedding -> None
        "node_feats": [x for _ in range(K)],  # excluded from stacking, kept as list
    }
    return stacked_outputs


def make_params(key, K, D, H, O):
    k1, k2, k3, k4 = jax.random.split(key, 4)
    w1 = jax.random.normal(k1, (K, D, H), jnp.float32) * 0.1
    b1 = jax.random.normal(k2, (K, 1, H), jnp.float32) * 0.01
    w2 = jax.random.normal(k3, (K, H, O), jnp.float32) * 0.1
    b2 = jax.random.normal(k4, (K, 1, O), jnp.float32) * 0.01
    return w1, b1, w2, b2


if __name__ == "__main__":
    K = 3      # ensemble members
    N = 8      # atoms
    D = 32     # per-atom input features
    H = 32     # hidden width
    O = 4      # 3 force components + 1 per-atom energy

    key = jax.random.PRNGKey(0)
    kx, kxyz, kp = jax.random.split(key, 3)
    x = jax.random.normal(kx, (N, D), jnp.float32)
    xyz = jax.random.normal(kxyz, (N, 3), jnp.float32)
    params = make_params(kp, K, D, H, O)

    out = ensemble_forward(xyz, x, params)
    jax.block_until_ready(out["energy"])
    jax.block_until_ready(out["forces"])

    # Pure-JAX reference check of the fused hot path.
    w1, b1, w2, b2 = params
    h_ref = jnp.maximum(jnp.einsum("nd,kdh->knh", x, w1) + b1, 0.0)
    raw_ref = jnp.einsum("knh,kho->kno", h_ref, w2) + b2
    energy_ref = jnp.stack([jnp.sum(raw_ref[k, :, 3]) for k in range(K)], axis=-1)
    forces_ref = jnp.stack([raw_ref[k, :, :3] for k in range(K)], axis=-1)

    assert out["xyz"].shape == (N, 3)
    assert out["energy"].shape == (K,)
    assert out["forces"].shape == (N, 3, K)
    assert out["embedding"] is None
    assert isinstance(out["node_feats"], list) and len(out["node_feats"]) == K
    assert jnp.allclose(out["energy"], energy_ref, atol=1e-4)
    assert jnp.allclose(out["forces"], forces_ref, atol=1e-4)

    print("KERNEL_OK")
</pallas_src>

<mosaic_0001>
module attributes {stable_mosaic.version = 11 : i64} {
  func.func @_ensemble_packed_kernel(%arg0: memref<8x32xf32, #tpu.memory_space<vmem>>, %arg1: memref<32x128xf32, #tpu.memory_space<vmem>>, %arg2: memref<1x128xf32, #tpu.memory_space<vmem>>, %arg3: memref<128x128xf32, #tpu.memory_space<vmem>>, %arg4: memref<1x128xf32, #tpu.memory_space<vmem>>, %arg5: memref<128x128xf32, #tpu.memory_space<vmem>>, %arg6: memref<8x128xf32, #tpu.memory_space<vmem>>, %arg7: memref<1x128xf32, #tpu.memory_space<vmem>>) attributes {dimension_semantics = [], scalar_prefetch = 0 : i64, scratch_operands = 0 : i64, tpu.core_type = #tpu.core_type<tc>} {
    %c0 = arith.constant 0 : index
    %c0_0 = arith.constant 0 : index
    %0 = vector.load %arg0[%c0, %c0_0] : memref<8x32xf32, #tpu.memory_space<vmem>>, vector<8x32xf32>
    %c0_1 = arith.constant 0 : index
    %c0_2 = arith.constant 0 : index
    %1 = vector.load %arg1[%c0_1, %c0_2] : memref<32x128xf32, #tpu.memory_space<vmem>>, vector<32x128xf32>
    %cst = arith.constant dense<0.000000e+00> : vector<8x128xf32>
    %2 = tpu.matmul %0, %1, %cst {dimension_numbers = #tpu.dot_dimension_numbers<[1], [0], [0], [1], [0, 0, 1, 1], [], []>} : vector<8x32xf32>, vector<32x128xf32>, vector<8x128xf32> -> vector<8x128xf32>
    %c0_3 = arith.constant 0 : index
    %c0_4 = arith.constant 0 : index
    %3 = vector.load %arg2[%c0_3, %c0_4] : memref<1x128xf32, #tpu.memory_space<vmem>>, vector<1x128xf32>
    %4 = vector.broadcast %3 : vector<1x128xf32> to vector<8x128xf32>
    %5 = arith.addf %2, %4 : vector<8x128xf32>
    %cst_5 = arith.constant 0.000000e+00 : f32
    %6 = vector.broadcast %cst_5 : f32 to vector<8x128xf32>
    %7 = arith.maximumf %5, %6 : vector<8x128xf32>
    %c0_6 = arith.constant 0 : index
    %c0_7 = arith.constant 0 : index
    %8 = vector.load %arg3[%c0_6, %c0_7] : memref<128x128xf32, #tpu.memory_space<vmem>>, vector<128x128xf32>
    %cst_8 = arith.constant dense<0.000000e+00> : vector<8x128xf32>
    %9 = tpu.matmul %7, %8, %cst_8 {dimension_numbers = #tpu.dot_dimension_numbers<[1], [0], [0], [1], [0, 0, 1, 1], [], []>} : vector<8x128xf32>, vector<128x128xf32>, vector<8x128xf32> -> vector<8x128xf32>
    %c0_9 = arith.constant 0 : index
    %c0_10 = arith.constant 0 : index
    %10 = vector.load %arg4[%c0_9, %c0_10] : memref<1x128xf32, #tpu.memory_space<vmem>>, vector<1x128xf32>
    %11 = vector.broadcast %10 : vector<1x128xf32> to vector<8x128xf32>
    %12 = arith.addf %9, %11 : vector<8x128xf32>
    %c0_11 = arith.constant 0 : index
    %c0_12 = arith.constant 0 : index
    %13 = vector.load %arg6[%c0_11, %c0_12] : memref<8x128xf32, #tpu.memory_space<vmem>>, vector<8x128xf32>
    tpu.vector_store %arg6[%c0_11, %c0_12], %12 {strides = array<i32>} : memref<8x128xf32, #tpu.memory_space<vmem>>, vector<8x128xf32>,
    %14 = tpu.iota {dimensions = array<i32: 0>} : vector<8x128xi32>
    %c8_i32 = arith.constant 8 : i32
    %15 = vector.broadcast %c8_i32 : i32 to vector<8x128xi32>
    %16 = arith.cmpi slt, %14, %15 : vector<8x128xi32>
    %cst_13 = arith.constant 0.000000e+00 : f32
    %17 = vector.broadcast %cst_13 : f32 to vector<8x128xf32>
    %18 = arith.select %16, %12, %17 : vector<8x128xi1>, vector<8x128xf32>
    %cst_14 = arith.constant dense<0.000000e+00> : vector<128xf32>
    %19 = vector.multi_reduction <add>, %18, %cst_14 [0] : vector<8x128xf32> to vector<128xf32>
    %20 = vector.shape_cast %19 : vector<128xf32> to vector<1x128xf32>
    %c0_15 = arith.constant 0 : index
    %c0_16 = arith.constant 0 : index
    %21 = vector.load %arg5[%c0_15, %c0_16] : memref<128x128xf32, #tpu.memory_space<vmem>>, vector<128x128xf32>
    %cst_17 = arith.constant dense<0.000000e+00> : vector<1x128xf32>
    %22 = tpu.matmul %20, %21, %cst_17 {dimension_numbers = #tpu.dot_dimension_numbers<[1], [0], [0], [1], [0, 0, 1, 1], [], []>} : vector<1x128xf32>, vector<128x128xf32>, vector<1x128xf32> -> vector<1x128xf32>
    %c0_18 = arith.constant 0 : index
    %c0_19 = arith.constant 0 : index
    %23 = vector.load %arg7[%c0_18, %c0_19] : memref<1x128xf32, #tpu.memory_space<vmem>>, vector<1x128xf32>
    tpu.vector_store %arg7[%c0_18, %c0_19], %22 {strides = array<i32>} : memref<1x128xf32, #tpu.memory_space<vmem>>, vector<1x128xf32>,
    return
  }
}

</mosaic_0001>

<llo_original>
// kernel: tpu_custom_call.1
$region0: #{tpu_custom_call.1}
  #allocation0 [shape = 'u32[]', space=smem, size = 0x4, offset = 0x4, fixed_abs, tag = 'smem constant byte address 0x4 - core index']
  #allocation1 [shape = 'u32[144,128]{1,0:T(1,128)}', space=vmem, size = 0x12000, scoped, tag = 'internal scratch']
  %s0 = inlined_call_operand.hbm [shape: f32[8,32], index: 0, kind: input, shape index: {}]
  %s1 = inlined_call_operand.hbm [shape: f32[32,128], index: 1, kind: input, shape index: {}]
  %s2 = inlined_call_operand.vmem [shape: f32[1,128], index: 2, kind: input, shape index: {}]
  %s3 = inlined_call_operand.hbm [shape: f32[128,128], index: 3, kind: input, shape index: {}]
  %s4 = inlined_call_operand.vmem [shape: f32[1,128], index: 4, kind: input, shape index: {}]
  %s5 = inlined_call_operand.hbm [shape: f32[128,128], index: 5, kind: input, shape index: {}]
  %s6 = inlined_call_operand.hbm [shape: f32[8,128], index: 6, kind: output, shape index: {0}]
  %s7 = inlined_call_operand.hbm [shape: f32[1,128], index: 7, kind: output, shape index: {1}]
  %8 = xla_tuple %s6, %s7
  %s9 = sld [smem:[#allocation0]]
  $region58: #{tpu_custom_call.1} parent=0
    _
  %s11 = ssub.s32 1, %s9
  %s12 = scalar_select 0, %s11, %s9
  $region1: #{tpu_custom_call.1} parent=0
    #allocation2 [shape = 'u8[4096]{0}', space=vmem, size = 0x1000, scoped, tag = 'input window, operand 0, single buffered']
    #allocation3 [shape = 's32[1]{0}', space=sflag, size = 0x4, scoped, tag = 'scoped memory for tpu_custom_call.1']
    #allocation4 [shape = 's32[1]{0}', space=sflag, size = 0x4, scoped, tag = 'scoped memory for tpu_custom_call.1']
    #allocation5 [shape = 'u8[16384]{0}', space=vmem, size = 0x4000, scoped, tag = 'input window, operand 1, single buffered']
    #allocation6 [shape = 's32[1]{0}', space=sflag, size = 0x4, scoped, tag = 'scoped memory for tpu_custom_call.1']
    #allocation7 [shape = 'u8[65536]{0}', space=vmem, size = 0x10000, scoped, tag = 'input window, operand 3, single buffered']
    #allocation8 [shape = 'u8[65536]{0}', space=vmem, size = 0x10000, scoped, tag = 'input window, operand 5, single buffered']
    #allocation9 [shape = 's32[1]{0}', space=sflag, size = 0x4, scoped, tag = 'scoped memory for tpu_custom_call.1']
    #allocation10 [shape = 'u8[4096]{0}', space=vmem, size = 0x1000, scoped, tag = 'output window, operand 0, single buffered']
    #allocation11 [shape = 'u8[512]{0}', space=vmem, size = 0x400, scoped, tag = 'output window, operand 1, single buffered']
    #allocation12 [shape = 's32[1]{0}', space=sflag, size = 0x4, scoped, tag = 'scoped memory for tpu_custom_call.1']
    %13 = vsyncpa [#allocation3], 0
    %14 = vsyncpa [#allocation6], 0
    %15 = vsyncpa [#allocation9], 0
    %16 = vsyncpa [#allocation4], 0
    %17 = vsyncpa [#allocation12], 0
    // Predicated region
    $region2: #{tpu_custom_call.1} parent=1 // pred_check
      _
    $region3: #{tpu_custom_call.1} parent=1 // pred_check_branch
      %19 = sbr.rel (0) target = $region5
    $region4: #{tpu_custom_call.1} parent=1 // pred_region
      %s21 = ssub.s32 128, 128
      %22 = vsyncadd [#allocation3], %s21
      %s24 = sshll.u32 [#allocation2], 4
      %s25 = int_to_ptr.vmem [resolvable:$true] %s24
      %27 = dma.hbm_to_vmem [thread:$0]  %s0, 128, %s25, [#allocation3]
    $region5: #{tpu_custom_call.1} parent=1 // pred_fallthru
      _
    // Predicated region
    $region6: #{tpu_custom_call.1} parent=1 // pred_check
      _
    $region7: #{tpu_custom_call.1} parent=1 // pred_check_branch
      %29 = sbr.rel (0) target = $region9
    $region8: #{tpu_custom_call.1} parent=1 // pred_region
      %s31 = ssub.s32 512, 512
      %32 = vsyncadd [#allocation6], %s31
      %s33 = sshll.u32 [#allocation5], 4
      %s34 = int_to_ptr.vmem [resolvable:$true] %s33
      %39 = dma.hbm_to_vmem [thread:$0]  %s1, 512, %s34, [#allocation6], 128, 128, 8
    $region9: #{tpu_custom_call.1} parent=1 // pred_fallthru
      _
    // Predicated region
    $region10: #{tpu_custom_call.1} parent=1 // pred_check
      _
    $region11: #{tpu_custom_call.1} parent=1 // pred_check_branch
      %41 = sbr.rel (0) target = $region13
    $region12: #{tpu_custom_call.1} parent=1 // pred_region
      _
    $region13: #{tpu_custom_call.1} parent=1 // pred_fallthru
      _
    // Predicated region
    $region14: #{tpu_custom_call.1} parent=1 // pred_check
      _
    $region15: #{tpu_custom_call.1} parent=1 // pred_check_branch
      %43 = sbr.rel (0) target = $region17
    $region16: #{tpu_custom_call.1} parent=1 // pred_region
      %s45 = ssub.s32 2048, 2048
      %46 = vsyncadd [#allocation6], %s45
      %s47 = sshll.u32 [#allocation7], 4
      %s48 = int_to_ptr.vmem [resolvable:$true] %s47
      %53 = dma.hbm_to_vmem [thread:$0]  %s3, 2048, %s48, [#allocation6], 128, 128, 8
    $region17: #{tpu_custom_call.1} parent=1 // pred_fallthru
      _
    // Predicated region
    $region18: #{tpu_custom_call.1} parent=1 // pred_check
      _
    $region19: #{tpu_custom_call.1} parent=1 // pred_check_branch
      %55 = sbr.rel (0) target = $region21
    $region20: #{tpu_custom_call.1} parent=1 // pred_region
      _
    $region21: #{tpu_custom_call.1} parent=1 // pred_fallthru
      _
    // Predicated region
    $region22: #{tpu_custom_call.1} parent=1 // pred_check
      _
    $region23: #{tpu_custom_call.1} parent=1 // pred_check_branch
      %57 = sbr.rel (0) target = $region25
    $region24: #{tpu_custom_call.1} parent=1 // pred_region
      %s59 = ssub.s32 2048, 2048
      %60 = vsyncadd [#allocation9], %s59
      %s61 = sshll.u32 [#allocation8], 4
      %s62 = int_to_ptr.vmem [resolvable:$true] %s61
      %67 = dma.hbm_to_vmem [thread:$0]  %s5, 2048, %s62, [#allocation9], 128, 128, 8
    $region25: #{tpu_custom_call.1} parent=1 // pred_fallthru
      _
    // Predicated region
    $region26: #{tpu_custom_call.1} parent=1 // pred_check
      _
    $region27: #{tpu_custom_call.1} parent=1 // pred_check_branch
      %69 = sbr.rel (0) target = $region29
    $region28: #{tpu_custom_call.1} parent=1 // pred_region
      %70 = dma.done [#allocation3], 128
    $region29: #{tpu_custom_call.1} parent=1 // pred_fallthru
      _
    // Predicated region
    $region30: #{tpu_custom_call.1} parent=1 // pred_check
      _
    $region31: #{tpu_custom_call.1} parent=1 // pred_check_branch
      %72 = sbr.rel (0) target = $region33
    $region32: #{tpu_custom_call.1} parent=1 // pred_region
      %73 = dma.done [#allocation6], 512
    $region33: #{tpu_custom_call.1} parent=1 // pred_fallthru
      _
    // Predicated region
    $region34: #{tpu_custom_call.1} parent=1 // pred_check
      _
    $region35: #{tpu_custom_call.1} parent=1 // pred_check_branch
      %75 = sbr.rel (0) target = $region37
    $region36: #{tpu_custom_call.1} parent=1 // pred_region
      %76 = dma.done [#allocation6], 2048
    $region37: #{tpu_custom_call.1} parent=1 // pred_fallthru
      _
    // Predicated region
    $region38: #{tpu_custom_call.1} parent=1 // pred_check
      _
    $region39: #{tpu_custom_call.1} parent=1 // pred_check_branch
      %78 = sbr.rel (0) target = $region41
    $region40: #{tpu_custom_call.1} parent=1 // pred_region
      %79 = dma.done [#allocation9], 2048
    $region41: #{tpu_custom_call.1} parent=1 // pred_fallthru
      _
    %v80 = vld [vmem:[#allocation2] sm:$0xff]
    %v81 = vld [vmem:[#allocation5] sm:$0xff]
    %v82 = vld [vmem:[#allocation5 + $0x8] sm:$0xff]
    %v83 = vld [vmem:[#allocation5 + $0x10] sm:$0xff]
    %v84 = vld [vmem:[#allocation5 + $0x18] sm:$0xff]
    %v85 = vld [vmem:[%s2] sm:$0x1]
    %v87 = vlaneseq
    %v88 = vshrl.u32 %v87, 7
    %v89 = vsub.s32 0, %v88
    %v90 = vrot.slane %v85, %v89
    %vm92 = vcmask 261120
    %v94 = vsel %vm92, %v80, 0
    %96 = vmatprep.subr.mxu0 0.0
    %97 = vmatpush1.msra.mxu0 %v81
    %98 = vmatprep.subr.mxu0 0.0
    %99 = vmatpush1.msra.mxu0 %v82
    %100 = vmatprep.subr.mxu0 0.0
    %101 = vmatpush1.msra.mxu0 %v83
    %102 = vmatprep.subr.mxu0 0.0
    %103 = vmatpush1.msra.mxu0 %v84
    %104 = vmatprep.subr.mxu0 0.0
    %105 = vmatpush1.msra.mxu0 0.0
    %106 = vmatprep.subr.mxu0 0.0
    %107 = vmatpush1.msra.mxu0 0.0
    %108 = vmatprep.subr.mxu0 0.0
    %109 = vmatpush1.msra.mxu0 0.0
    %110 = vmatprep.subr.mxu0 0.0
    %111 = vmatpush1.msra.mxu0 0.0
    %112 = vmatprep.subr.mxu0 0.0
    %113 = vmatpush1.msra.mxu0 0.0
    %114 = vmatprep.subr.mxu0 0.0
    %115 = vmatpush1.msra.mxu0 0.0
    %116 = vmatprep.subr.mxu0 0.0
    %117 = vmatpush1.msra.mxu0 0.0
    %118 = vmatprep.subr.mxu0 0.0
    %119 = vmatpush1.msra.mxu0 0.0
    %120 = vmatprep.subr.mxu0 0.0
    %121 = vmatpush1.msra.mxu0 0.0
    %122 = vmatprep.subr.mxu0 0.0
    %123 = vmatpush1.msra.mxu0 0.0
    %124 = vmatprep.subr.mxu0 0.0
    %125 = vmatpush1.msra.mxu0 0.0
    %126 = vmatprep.subr.mxu0 0.0
    %127 = vmatpush1.msra.mxu0 0.0
    %128 = vmatprep.subr.mxu0 0.0
    %129 = vmatpush1.msra.mxu0 0.0
    %130 = vmatprep.subr.mxu0 0.0
    %131 = vmatpush1.msra.mxu0 0.0
    %132 = vmatprep.subr.mxu0 0.0
    %133 = vmatpush1.msra.mxu0 0.0
    %134 = vmatprep.subr.mxu0 0.0
    %135 = vmatpush1.msra.mxu0 0.0
    %136 = vmatprep.subr.mxu0 0.0
    %137 = vmatpush1.msra.mxu0 0.0
    %138 = vmatprep.subr.mxu0 0.0
    %139 = vmatpush1.msra.mxu0 0.0
    %140 = vmatprep.subr.mxu0 0.0
    %141 = vmatpush1.msra.mxu0 0.0
    %142 = vmatprep.subr.mxu0 0.0
    %143 = vmatpush1.msra.mxu0 0.0
    %144 = vmatprep.subr.mxu0 0.0
    %145 = vmatpush1.msra.mxu0 0.0
    %146 = vmatprep.subr.mxu0 0.0
    %147 = vmatpush1.msra.mxu0 0.0
    %148 = vmatprep.subr.mxu0 0.0
    %149 = vmatpush1.msra.mxu0 0.0
    %150 = vmatprep.subr.mxu0 0.0
    %151 = vmatpush1.msra.mxu0 0.0
    %152 = vmatprep.subr.mxu0 0.0
    %153 = vmatpush1.msra.mxu0 0.0
    %154 = vmatprep.subr.mxu0 0.0
    %155 = vmatpush1.msra.mxu0 0.0
    %156 = vmatprep.subr.mxu0 0.0
    %157 = vmatpush1.msra.mxu0 0.0
    %158 = vmatprep.subr.mxu0 0.0
    %159 = vmatpush1.msra.mxu0 0.0
    %160 = vmatprep.mubr.f32.mxu0 0.0
    %161 = vmatmul.mubr.f32.gmra.mrb[0].mxu0 %v94
    %v162 = vpop.f32.mrb[0].mxu0
    %v163 = vadd.f32 %v90, %v162
    %v164 = vpop.f32.mrb[0].mxu0
    %165 = vdwg.mxu0
    %v166 = vmax.f32 %v163, 0.0
    %v167 = vld [vmem:[#allocation7] sm:$0xff]
    %v168 = vld [vmem:[#allocation7 + $0x8] sm:$0xff]
    %v169 = vld [vmem:[#allocation7 + $0x10] sm:$0xff]
    %v170 = vld [vmem:[#allocation7 + $0x18] sm:$0xff]
    %v171 = vld [vmem:[#allocation7 + $0x20] sm:$0xff]
    %v172 = vld [vmem:[#allocation7 + $0x28] sm:$0xff]
    %v173 = vld [vmem:[#allocation7 + $0x30] sm:$0xff]
    %v174 = vld [vmem:[#allocation7 + $0x38] sm:$0xff]
    %v175 = vld [vmem:[#allocation7 + $0x40] sm:$0xff]
    %v176 = vld [vmem:[#allocation7 + $0x48] sm:$0xff]
    %v177 = vld [vmem:[#allocation7 + $0x50] sm:$0xff]
    %v178 = vld [vmem:[#allocation7 + $0x58] sm:$0xff]
    %v179 = vld [vmem:[#allocation7 + $0x60] sm:$0xff]
    %v180 = vld [vmem:[#allocation7 + $0x68] sm:$0xff]
    %v181 = vld [vmem:[#allocation7 + $0x70] sm:$0xff]
    %v182 = vld [vmem:[#allocation7 + $0x78] sm:$0xff]
    %v183 = vld [vmem:[%s4] sm:$0x1]
    %v185 = vlaneseq
    %v186 = vshrl.u32 %v185, 7
    %v187 = vsub.s32 0, %v186
    %v188 = vrot.slane %v183, %v187
    %190 = vmatprep.subr.mxu0 0.0
    %191 = vmatpush1.msra.mxu0 %v167
    %192 = vmatprep.subr.mxu0 0.0
    %193 = vmatpush1.msra.mxu0 %v168
    %194 = vmatprep.subr.mxu0 0.0
    %195 = vmatpush1.msra.mxu0 %v169
    %196 = vmatprep.subr.mxu0 0.0
    %197 = vmatpush1.msra.mxu0 %v170
    %198 = vmatprep.subr.mxu0 0.0
    %199 = vmatpush1.msra.mxu0 %v171
    %200 = vmatprep.subr.mxu0 0.0
    %201 = vmatpush1.msra.mxu0 %v172
    %202 = vmatprep.subr.mxu0 0.0
    %203 = vmatpush1.msra.mxu0 %v173
    %204 = vmatprep.subr.mxu0 0.0
    %205 = vmatpush1.msra.mxu0 %v174
    %206 = vmatprep.subr.mxu0 0.0
    %207 = vmatpush1.msra.mxu0 %v175
    %208 = vmatprep.subr.mxu0 0.0
    %209 = vmatpush1.msra.mxu0 %v176
    %210 = vmatprep.subr.mxu0 0.0
    %211 = vmatpush1.msra.mxu0 %v177
    %212 = vmatprep.subr.mxu0 0.0
    %213 = vmatpush1.msra.mxu0 %v178
    %214 = vmatprep.subr.mxu0 0.0
    %215 = vmatpush1.msra.mxu0 %v179
    %216 = vmatprep.subr.mxu0 0.0
    %217 = vmatpush1.msra.mxu0 %v180
    %218 = vmatprep.subr.mxu0 0.0
    %219 = vmatpush1.msra.mxu0 %v181
    %220 = vmatprep.subr.mxu0 0.0
    %221 = vmatpush1.msra.mxu0 %v182
    %222 = vmatprep.subr.mxu0 0.0
    %223 = vmatpush1.msra.mxu0 0.0
    %224 = vmatprep.subr.mxu0 0.0
    %225 = vmatpush1.msra.mxu0 0.0
    %226 = vmatprep.subr.mxu0 0.0
    %227 = vmatpush1.msra.mxu0 0.0
    %228 = vmatprep.subr.mxu0 0.0
    %229 = vmatpush1.msra.mxu0 0.0
    %230 = vmatprep.subr.mxu0 0.0
    %231 = vmatpush1.msra.mxu0 0.0
    %232 = vmatprep.subr.mxu0 0.0
    %233 = vmatpush1.msra.mxu0 0.0
    %234 = vmatprep.subr.mxu0 0.0
    %235 = vmatpush1.msra.mxu0 0.0
    %236 = vmatprep.subr.mxu0 0.0
    %237 = vmatpush1.msra.mxu0 0.0
    %238 = vmatprep.subr.mxu0 0.0
    %239 = vmatpush1.msra.mxu0 0.0
    %240 = vmatprep.subr.mxu0 0.0
    %241 = vmatpush1.msra.mxu0 0.0
    %242 = vmatprep.subr.mxu0 0.0
    %243 = vmatpush1.msra.mxu0 0.0
    %244 = vmatprep.subr.mxu0 0.0
    %245 = vmatpush1.msra.mxu0 0.0
    %246 = vmatprep.subr.mxu0 0.0
    %247 = vmatpush1.msra.mxu0 0.0
    %248 = vmatprep.subr.mxu0 0.0
    %249 = vmatpush1.msra.mxu0 0.0
    %250 = vmatprep.subr.mxu0 0.0
    %251 = vmatpush1.msra.mxu0 0.0
    %252 = vmatprep.subr.mxu0 0.0
    %253 = vmatpush1.msra.mxu0 0.0
    %254 = vmatprep.mubr.f32.mxu0 0.0
    %255 = vmatmul.mubr.f32.gmra.mrb[0].mxu0 %v166
    %v256 = vpop.f32.mrb[0].mxu0
    %v257 = vadd.f32 %v188, %v256
    %v258 = vpop.f32.mrb[0].mxu0
    %259 = vdwg.mxu0
    %260 = vst [vmem:[#allocation10] sm:$0xff] %v257
    %v261 = vlaneseq
    %v262 = vshrl.u32 %v261, 7
    %vm263 = vcmp.lt.s32.totalorder %v262, 8
    %v264 = vsel %vm263, %v257, 0.0
    %v265 = vrot.slane %v264, 4
    %v266 = vadd.f32 %v264, %v265
    %v267 = vrot.slane %v266, 2
    %v268 = vadd.f32 %v266, %v267
    %v269 = vrot.slane %v268, 1
    %v270 = vadd.f32 %v268, %v269
    %v271 = vld [vmem:[#allocation8] sm:$0xff]
    %v272 = vld [vmem:[#allocation8 + $0x8] sm:$0xff]
    %v273 = vld [vmem:[#allocation8 + $0x10] sm:$0xff]
    %v274 = vld [vmem:[#allocation8 + $0x18] sm:$0xff]
    %v275 = vld [vmem:[#allocation8 + $0x20] sm:$0xff]
    %v276 = vld [vmem:[#allocation8 + $0x28] sm:$0xff]
    %v277 = vld [vmem:[#allocation8 + $0x30] sm:$0xff]
    %v278 = vld [vmem:[#allocation8 + $0x38] sm:$0xff]
    %v279 = vld [vmem:[#allocation8 + $0x40] sm:$0xff]
    %v280 = vld [vmem:[#allocation8 + $0x48] sm:$0xff]
    %v281 = vld [vmem:[#allocation8 + $0x50] sm:$0xff]
    %v282 = vld [vmem:[#allocation8 + $0x58] sm:$0xff]
    %v283 = vld [vmem:[#allocation8 + $0x60] sm:$0xff]
    %v284 = vld [vmem:[#allocation8 + $0x68] sm:$0xff]
    %v285 = vld [vmem:[#allocation8 + $0x70] sm:$0xff]
    %v286 = vld [vmem:[#allocation8 + $0x78] sm:$0xff]
    %287 = vmatprep.subr.mxu0 0.0
    %288 = vmatpush1.msra.mxu0 %v271
    %289 = vmatprep.subr.mxu0 0.0
    %290 = vmatpush1.msra.mxu0 %v272
    %291 = vmatprep.subr.mxu0 0.0
    %292 = vmatpush1.msra.mxu0 %v273
    %293 = vmatprep.subr.mxu0 0.0
    %294 = vmatpush1.msra.mxu0 %v274
    %295 = vmatprep.subr.mxu0 0.0
    %296 = vmatpush1.msra.mxu0 %v275
    %297 = vmatprep.subr.mxu0 0.0
    %298 = vmatpush1.msra.mxu0 %v276
    %299 = vmatprep.subr.mxu0 0.0
    %300 = vmatpush1.msra.mxu0 %v277
    %301 = vmatprep.subr.mxu0 0.0
    %302 = vmatpush1.msra.mxu0 %v278
    %303 = vmatprep.subr.mxu0 0.0
    %304 = vmatpush1.msra.mxu0 %v279
    %305 = vmatprep.subr.mxu0 0.0
    %306 = vmatpush1.msra.mxu0 %v280
    %307 = vmatprep.subr.mxu0 0.0
    %308 = vmatpush1.msra.mxu0 %v281
    %309 = vmatprep.subr.mxu0 0.0
    %310 = vmatpush1.msra.mxu0 %v282
    %311 = vmatprep.subr.mxu0 0.0
    %312 = vmatpush1.msra.mxu0 %v283
    %313 = vmatprep.subr.mxu0 0.0
    %314 = vmatpush1.msra.mxu0 %v284
    %315 = vmatprep.subr.mxu0 0.0
    %316 = vmatpush1.msra.mxu0 %v285
    %317 = vmatprep.subr.mxu0 0.0
    %318 = vmatpush1.msra.mxu0 %v286
    %319 = vmatprep.subr.mxu0 0.0
    %320 = vmatpush1.msra.mxu0 0.0
    %321 = vmatprep.subr.mxu0 0.0
    %322 = vmatpush1.msra.mxu0 0.0
    %323 = vmatprep.subr.mxu0 0.0
    %324 = vmatpush1.msra.mxu0 0.0
    %325 = vmatprep.subr.mxu0 0.0
    %326 = vmatpush1.msra.mxu0 0.0
    %327 = vmatprep.subr.mxu0 0.0
    %328 = vmatpush1.msra.mxu0 0.0
    %329 = vmatprep.subr.mxu0 0.0
    %330 = vmatpush1.msra.mxu0 0.0
    %331 = vmatprep.subr.mxu0 0.0
    %332 = vmatpush1.msra.mxu0 0.0
    %333 = vmatprep.subr.mxu0 0.0
    %334 = vmatpush1.msra.mxu0 0.0
    %335 = vmatprep.subr.mxu0 0.0
    %336 = vmatpush1.msra.mxu0 0.0
    %337 = vmatprep.subr.mxu0 0.0
    %338 = vmatpush1.msra.mxu0 0.0
    %339 = vmatprep.subr.mxu0 0.0
    %340 = vmatpush1.msra.mxu0 0.0
    %341 = vmatprep.subr.mxu0 0.0
    %342 = vmatpush1.msra.mxu0 0.0
    %343 = vmatprep.subr.mxu0 0.0
    %344 = vmatpush1.msra.mxu0 0.0
    %345 = vmatprep.subr.mxu0 0.0
    %346 = vmatpush1.msra.mxu0 0.0
    %347 = vmatprep.subr.mxu0 0.0
    %348 = vmatpush1.msra.mxu0 0.0
    %349 = vmatprep.subr.mxu0 0.0
    %350 = vmatpush1.msra.mxu0 0.0
    %351 = vmatprep.mubr.f32.mxu0 0.0
    %352 = vmatmul.mubr.f32.gmra.mrb[0].mxu0 %v270
    %v353 = vpop.f32.mrb[0].mxu0
    %v354 = vadd.f32 0.0, %v353
    %v355 = vpop.f32.mrb[0].mxu0
    %356 = vdwg.mxu0
    %357 = vst [vmem:[#allocation11] sm:$0x1] %v354
    // Predicated region
    $region42: #{tpu_custom_call.1} parent=1 // pred_check
      _
    $region43: #{tpu_custom_call.1} parent=1 // pred_check_branch
      %359 = sbr.rel (0) target = $region45
    $region44: #{tpu_custom_call.1} parent=1 // pred_region
      %s361 = ssub.s32 128, 128
      %362 = vsyncadd [#allocation4], %s361
      %s364 = sshll.u32 [#allocation10], 4
      %s365 = int_to_ptr.vmem [resolvable:$true] %s364
      %367 = dma.vmem_to_hbm [thread:$0]  %s365, 128, %s6, [#allocation4]
    $region45: #{tpu_custom_call.1} parent=1 // pred_fallthru
      _
    // Predicated region
    $region46: #{tpu_custom_call.1} parent=1 // pred_check
      _
    $region47: #{tpu_custom_call.1} parent=1 // pred_check_branch
      %369 = sbr.rel (0) target = $region49
    $region48: #{tpu_custom_call.1} parent=1 // pred_region
      %s371 = ssub.s32 16, 16
      %372 = vsyncadd [#allocation12], %s371
      %s374 = sshll.u32 [#allocation11], 4
      %s375 = int_to_ptr.vmem [resolvable:$true] %s374
      %377 = dma.vmem_to_hbm [thread:$0]  %s375, 16, %s7, [#allocation12]
    $region49: #{tpu_custom_call.1} parent=1 // pred_fallthru
      _
    // Predicated region
    $region50: #{tpu_custom_call.1} parent=1 // pred_check
      _
    $region51: #{tpu_custom_call.1} parent=1 // pred_check_branch
      %379 = sbr.rel (0) target = $region53
    $region52: #{tpu_custom_call.1} parent=1 // pred_region
      %380 = dma.done [#allocation4], 128
    $region53: #{tpu_custom_call.1} parent=1 // pred_fallthru
      _
    // Predicated region
    $region54: #{tpu_custom_call.1} parent=1 // pred_check
      _
    $region55: #{tpu_custom_call.1} parent=1 // pred_check_branch
      %382 = sbr.rel (0) target = $region57
    $region56: #{tpu_custom_call.1} parent=1 // pred_region
      %383 = dma.done [#allocation12], 16
    $region57: #{tpu_custom_call.1} parent=1 // pred_fallthru
      _
    %384 = vsyncpa [#allocation3], 1
    %385 = vsyncpa [#allocation6], 1
    %386 = vsyncpa [#allocation9], 1
    %387 = vsyncpa [#allocation4], 1
    %388 = vsyncpa [#allocation12], 1

</llo_original>
